<compile_context>
chip_gen: v5e
topology: v5e:2x2
jax: 0.10.0
libtpu: 0.0.40
codegen_flags: <defaults>
</compile_context>

<pallas_src>
import jax
import jax.numpy as jnp
from jax.experimental import pallas as pl
from jax.experimental.pallas import tpu as pltpu

F32 = jnp.float32
BF16 = jnp.bfloat16


# ------------------ Kernel 1: masking + first GCN projection ---------------- #
def mask_project_kernel(x_ref, m_ref, tok_ref, w0_ref, xw0_ref):
    # encoding_mask_noise (replace_rate == 0):
    #   out_x[mask_nodes] = 0 ; out_x[mask_nodes] += enc_mask_token
    use_x = jnp.where(m_ref[...] > 0.0, tok_ref[...], x_ref[...])       # bf16
    xw0_ref[...] = jnp.dot(use_x, w0_ref[...],
                           preferred_element_type=F32).astype(BF16)


# -------- Kernel 2: layer-1 aggregation + ReLU + layer-2 projection --------- #
def gcn1_kernel(a_ref, xw0_ref, b0_ref, w1_ref, h1w1_ref):
    h1 = jnp.dot(a_ref[...], xw0_ref[...],
                 preferred_element_type=F32) + b0_ref[...]
    h1 = jnp.maximum(h1, 0.0)                                            # ReLU
    h1w1_ref[...] = jnp.dot(h1.astype(BF16), w1_ref[...],
                            preferred_element_type=F32).astype(BF16)


# ------- Kernel 3: layer-2 aggregation + mean/var + decoder + MSE err ------- #
def gcn2_heads_kernel(
    a_ref, h1w1_ref, b1_ref,
    wmv_ref, bmv_ref,              # fused mean||var head (H, 2H), (1, 2H)
    wdec0_ref, bd0_ref,            # fused encoder_to_decoder @ decoder.Linear0
    wd1_ref, bd1_ref,              # decoder.Linear1
    x_ref, m_ref, alpha_ref,
    mv_ref, err_ref,
):
    # ---- encoder layer 2: relu(A_hat @ (H1 W1) + b1) ----
    h2 = jnp.dot(a_ref[...], h1w1_ref[...],
                 preferred_element_type=F32) + b1_ref[...]
    enc = jnp.maximum(h2, 0.0)                                           # (T, H) f32
    enc_bf = enc.astype(BF16)

    # ---- fused mean/var linear heads + F.normalize(dim=-1) ----
    mv = jnp.dot(enc_bf, wmv_ref[...],
                 preferred_element_type=F32) + bmv_ref[...]              # (T, 2H)
    H = mv.shape[-1] // 2
    mean = mv[:, :H]
    var = mv[:, H:]
    ss_m = jnp.sum(mean * mean, axis=-1, keepdims=True)
    ss_v = jnp.sum(var * var, axis=-1, keepdims=True)
    # F.normalize: x / max(||x||, 1e-12)  ==  x * rsqrt(max(||x||^2, 1e-24))
    inv_m = jax.lax.rsqrt(jnp.maximum(ss_m, 1e-24))
    inv_v = jax.lax.rsqrt(jnp.maximum(ss_v, 1e-24))
    mv_ref[...] = jnp.concatenate([mean * inv_m, var * inv_v], axis=-1)

    # ---- encoder_to_decoder (no bias) fused with decoder Linear0 ----
    # decoder_type == 'mlp'  =>  rep[mask_nodes] = 0 is NOT applied, so the two
    # consecutive Linears collapse into one (weights fused in the wrapper).
    d0 = jnp.dot(enc_bf, wdec0_ref[...],
                 preferred_element_type=F32) + bd0_ref[...]
    alpha = alpha_ref[0, 0]
    d0 = jnp.where(d0 >= 0.0, d0, alpha * d0)                            # PReLU
    # Dropout(0.2) in eval mode: identity.
    recon = jnp.dot(d0.astype(BF16), wd1_ref[...],
                    preferred_element_type=F32) + bd1_ref[...]

    # ---- masked MSE partials: per-row sum of squared masked diffs ----
    diff = (recon - x_ref[...]) * m_ref[...]
    err_ref[...] = jnp.sum(diff * diff, axis=-1, keepdims=True)


# ---------------------------------- wrapper --------------------------------- #
def _pick_tile(n):
    # v6e/v7x MXU likes >= 256-row LHS tiles when N allows.
    for t in (256, 128, 64, 32, 16, 8):
        if n % t == 0:
            return t
    return n


def premodel_forward(x, mask, a_hat, params, *, tile_n=None):
    """Fused PreModel forward; returns (rec_loss, mean_norm, var_norm)."""
    N, F = x.shape
    H = params["w0"].shape[1]
    if tile_n is None:
        tile_n = _pick_tile(N)
    assert N % tile_n == 0
    n_tiles = N // tile_n

    # bf16 casts for all matmul operands (f32 accumulation in-kernel).
    a_bf = a_hat.astype(BF16)
    x_bf = x.astype(BF16)
    tok_bf = params["enc_mask_token"].astype(BF16)
    w0, w1 = params["w0"].astype(BF16), params["w1"].astype(BF16)
    wd1 = params["wd1"].astype(BF16)
    # fused mean||var head: one 128-lane-wide matmul instead of two 64-lane.
    wmv = jnp.concatenate([params["wm"], params["wv"]], axis=1).astype(BF16)
    bmv = jnp.concatenate([params["bm"], params["bv"]], axis=1)
    # encoder_to_decoder (no bias) followed directly by decoder Linear0:
    # fuse weights in f32 in the wrapper (one MXU matmul saved per tile).
    wdec0 = (params["we2d"] @ params["wd0"]).astype(BF16)

    def row(cols):
        return pl.BlockSpec((tile_n, cols), lambda i: (i, 0))

    def full(arr):
        return pl.BlockSpec(arr.shape, lambda i: (0,) * arr.ndim)

    smem = pl.BlockSpec(memory_space=pltpu.MemorySpace.SMEM)
    par = pltpu.CompilerParams(dimension_semantics=("parallel",))

    # ---- stage 1: masked features -> X W0 (bf16), row-tiled ----
    xw0 = pl.pallas_call(
        mask_project_kernel,
        out_shape=jax.ShapeDtypeStruct((N, H), BF16),
        grid=(n_tiles,),
        in_specs=[row(F), row(1), full(tok_bf), full(w0)],
        out_specs=row(H),
        compiler_params=par,
    )(x_bf, mask, tok_bf, w0)

    # ---- stage 2: H1 = relu(A_hat @ XW0 + b0); emit H1 W1 (bf16) ----
    h1w1 = pl.pallas_call(
        gcn1_kernel,
        out_shape=jax.ShapeDtypeStruct((N, H), BF16),
        grid=(n_tiles,),
        in_specs=[
            pl.BlockSpec((tile_n, N), lambda i: (i, 0)),   # A_hat row tile
            full(xw0),                                     # resident (N, H)
            full(params["b0"]), full(w1),
        ],
        out_specs=row(H),
        compiler_params=par,
    )(a_bf, xw0, params["b0"], w1)

    # ---- stage 3: layer-2 aggregation + heads + decoder + masked-MSE rows ----
    mv, err = pl.pallas_call(
        gcn2_heads_kernel,
        out_shape=(
            jax.ShapeDtypeStruct((N, 2 * H), jnp.float32),  # packed mean||var
            jax.ShapeDtypeStruct((N, 1), jnp.float32),      # per-row sq. error
        ),
        grid=(n_tiles,),
        in_specs=[
            pl.BlockSpec((tile_n, N), lambda i: (i, 0)),    # A_hat row tile
            full(h1w1),                                     # resident (N, H)
            full(params["b1"]),
            full(wmv), full(bmv),
            full(wdec0), full(params["bd0"]),
            full(wd1), full(params["bd1"]),
            row(F), row(1),
            smem,                                           # PReLU alpha
        ],
        out_specs=(
            pl.BlockSpec((tile_n, 2 * H), lambda i: (i, 0)),
            row(1),
        ),
        compiler_params=par,
    )(a_bf, h1w1, params["b1"], wmv, bmv, wdec0, params["bd0"],
      wd1, params["bd1"], x, mask, params["prelu_alpha"])

    # MSELoss over recon[mask_nodes] vs x[mask_nodes] (num_mask * F elements).
    denom = jnp.maximum(params["denom"].reshape(()), 1.0)
    rec_loss = jnp.sum(err) / denom

    mean_n = mv[:, :H]
    var_n = mv[:, H:]
    return rec_loss, mean_n, var_n


# --------------------------- parameter / input setup ------------------------ #
def build_params(key, in_dim, num_hidden):
    def lin(k, fan_in, fan_out, scale=None):
        scale = scale if scale is not None else 1.0 / jnp.sqrt(fan_in)
        return (jax.random.uniform(k, (fan_in, fan_out), jnp.float32, -1.0, 1.0)
                * scale)

    ks = jax.random.split(key, 16)
    H, F = num_hidden, in_dim
    params = {
        # enc_mask_token: nn.Parameter(torch.zeros(1, in_dim))
        "enc_mask_token": jnp.zeros((1, F), jnp.float32),
        # encoder GCN (2 layers)
        "w0": lin(ks[0], F, H), "b0": jnp.zeros((1, H), jnp.float32),
        "w1": lin(ks[1], H, H), "b1": jnp.zeros((1, H), jnp.float32),
        # mean / var encoders (Linear H->H with bias)
        "wm": lin(ks[2], H, H), "bm": lin(ks[3], 1, H),
        "wv": lin(ks[4], H, H), "bv": lin(ks[5], 1, H),
        # encoder_to_decoder (Linear H->H, bias=False)
        "we2d": lin(ks[6], H, H),
        # decoder MLP: Linear(H->H) -> PReLU -> Dropout -> Linear(H->F)
        "wd0": lin(ks[7], H, H), "bd0": lin(ks[8], 1, H),
        "prelu_alpha": jnp.full((1, 1), 0.25, jnp.float32),
        "wd1": lin(ks[9], H, F), "bd1": lin(ks[10], 1, F),
    }
    return params


def build_graph(key, n_nodes):
    # deterministic random symmetric adjacency + self loops, GCN normalization
    a = (jax.random.uniform(key, (n_nodes, n_nodes)) < 0.05).astype(jnp.float32)
    a = jnp.maximum(a, a.T)
    a = a + jnp.eye(n_nodes, dtype=jnp.float32)
    a = jnp.minimum(a, 1.0)
    deg = jnp.sum(a, axis=-1)
    d_inv_sqrt = 1.0 / jnp.sqrt(deg)
    return a * d_inv_sqrt[:, None] * d_inv_sqrt[None, :]


if __name__ == "__main__":
    N, IN_DIM, NUM_HIDDEN = 512, 64, 64
    MASK_RATE = 0.3

    key = jax.random.PRNGKey(0)
    k_x, k_g, k_perm, k_p = jax.random.split(key, 4)

    x = jax.random.normal(k_x, (N, IN_DIM), jnp.float32)
    a_hat = build_graph(k_g, N)
    params = build_params(k_p, IN_DIM, NUM_HIDDEN)

    # encoding_mask_noise: random permutation, first int(mask_rate*N) masked
    num_mask = int(MASK_RATE * N)
    perm = jax.random.permutation(k_perm, N)
    mask_nodes = perm[:num_mask]
    mask = jnp.zeros((N, 1), jnp.float32).at[mask_nodes, 0].set(1.0)

    # MSELoss denominator: num_mask_nodes * in_dim elements (clamped in wrapper)
    params["denom"] = jnp.full((1, 1), float(num_mask * IN_DIM), jnp.float32)

    rec_loss, mean_n, var_n = premodel_forward(x, mask, a_hat, params)
    jax.block_until_ready((rec_loss, mean_n, var_n))
    print("KERNEL_OK")
</pallas_src>

<mosaic_0001>
module attributes {stable_mosaic.version = 11 : i64} {
  func.func @mask_project_kernel(%arg0: i32, %arg1: memref<256x64xbf16, #tpu.memory_space<vmem>>, %arg2: memref<256x1xf32, #tpu.memory_space<vmem>>, %arg3: memref<1x64xbf16, #tpu.memory_space<vmem>>, %arg4: memref<64x64xbf16, #tpu.memory_space<vmem>>, %arg5: memref<256x64xbf16, #tpu.memory_space<vmem>>) attributes {dimension_semantics = [#tpu.dimension_semantics<parallel>], iteration_bounds = array<i64: 2>, scalar_prefetch = 0 : i64, scratch_operands = 0 : i64, tpu.core_type = #tpu.core_type<tc>, window_params = [{transform_indices = @transform_0, window_bounds = array<i64: 256, 64>}, {transform_indices = @transform_1, window_bounds = array<i64: 256, 1>}, {pipeline_mode = #tpu.pipeline_mode<synchronous>, transform_indices = @transform_2, window_bounds = array<i64: 1, 64>}, {pipeline_mode = #tpu.pipeline_mode<synchronous>, transform_indices = @transform_3, window_bounds = array<i64: 64, 64>}, {transform_indices = @transform_4, window_bounds = array<i64: 256, 64>}]} {
    %c0 = arith.constant 0 : index
    %c0_0 = arith.constant 0 : index
    %0 = vector.load %arg2[%c0, %c0_0] : memref<256x1xf32, #tpu.memory_space<vmem>>, vector<256x1xf32>
    %cst = arith.constant 0.000000e+00 : f32
    %1 = vector.broadcast %cst : f32 to vector<256x1xf32>
    %2 = arith.cmpf ogt, %0, %1 : vector<256x1xf32>
    %c0_1 = arith.constant 0 : index
    %c0_2 = arith.constant 0 : index
    %3 = vector.load %arg3[%c0_1, %c0_2] : memref<1x64xbf16, #tpu.memory_space<vmem>>, vector<1x64xbf16>
    %c0_3 = arith.constant 0 : index
    %c0_4 = arith.constant 0 : index
    %4 = vector.load %arg1[%c0_3, %c0_4] : memref<256x64xbf16, #tpu.memory_space<vmem>>, vector<256x64xbf16>
    %5 = vector.shape_cast %2 : vector<256x1xi1> to vector<256x1xi1>
    %6 = vector.broadcast %5 : vector<256x1xi1> to vector<256x64xi1>
    %7 = vector.shape_cast %3 : vector<1x64xbf16> to vector<1x64xbf16>
    %8 = vector.broadcast %7 : vector<1x64xbf16> to vector<256x64xbf16>
    %9 = arith.select %6, %8, %4 : vector<256x64xi1>, vector<256x64xbf16>
    %c0_5 = arith.constant 0 : index
    %c0_6 = arith.constant 0 : index
    %10 = vector.load %arg4[%c0_5, %c0_6] : memref<64x64xbf16, #tpu.memory_space<vmem>>, vector<64x64xbf16>
    %cst_7 = arith.constant dense<0.000000e+00> : vector<256x64xf32>
    %11 = tpu.matmul %9, %10, %cst_7 {dimension_numbers = #tpu.dot_dimension_numbers<[1], [0], [0], [1], [0, 0, 1, 1], [], []>} : vector<256x64xbf16>, vector<64x64xbf16>, vector<256x64xf32> -> vector<256x64xf32>
    %12 = arith.truncf %11 : vector<256x64xf32> to vector<256x64xbf16>
    %c0_8 = arith.constant 0 : index
    %c0_9 = arith.constant 0 : index
    %13 = vector.load %arg5[%c0_8, %c0_9] : memref<256x64xbf16, #tpu.memory_space<vmem>>, vector<256x64xbf16>
    tpu.vector_store %arg5[%c0_8, %c0_9], %12 {strides = array<i32>} : memref<256x64xbf16, #tpu.memory_space<vmem>>, vector<256x64xbf16>,
    return
  }
  func.func @transform_0(%arg0: i32) -> (i32, i32) {
    %c0_i32 = arith.constant 0 : i32
    %c0_i32_0 = arith.constant 0 : i32
    return %arg0, %c0_i32 : i32, i32
  }
  func.func @transform_1(%arg0: i32) -> (i32, i32) {
    %c0_i32 = arith.constant 0 : i32
    %c0_i32_0 = arith.constant 0 : i32
    return %arg0, %c0_i32 : i32, i32
  }
  func.func @transform_2(%arg0: i32) -> (i32, i32) {
    %c0_i32 = arith.constant 0 : i32
    %c0_i32_0 = arith.constant 0 : i32
    %c0_i32_1 = arith.constant 0 : i32
    return %c0_i32, %c0_i32_0 : i32, i32
  }
  func.func @transform_3(%arg0: i32) -> (i32, i32) {
    %c0_i32 = arith.constant 0 : i32
    %c0_i32_0 = arith.constant 0 : i32
    %c0_i32_1 = arith.constant 0 : i32
    return %c0_i32, %c0_i32_0 : i32, i32
  }
  func.func @transform_4(%arg0: i32) -> (i32, i32) {
    %c0_i32 = arith.constant 0 : i32
    %c0_i32_0 = arith.constant 0 : i32
    return %arg0, %c0_i32 : i32, i32
  }
}

</mosaic_0001>

<llo_original>
// kernel: tpu_custom_call.1
$region0: #{tpu_custom_call.1}
  #allocation0 [shape = 'u32[]', space=smem, size = 0x4, offset = 0x4, fixed_abs, tag = 'smem constant byte address 0x4 - core index']
  #allocation1 [shape = 'u32[72,128]{1,0:T(1,128)}', space=vmem, size = 0x9000, scoped, tag = 'internal scratch']
  %s0 = inlined_call_operand.vmem [shape: bf16[512,64], index: 0, kind: input, shape index: {}]
  %s1 = inlined_call_operand.vmem [shape: f32[512,1], index: 1, kind: input, shape index: {}]
  %s2 = inlined_call_operand.vmem [shape: bf16[1,64], index: 2, kind: input, shape index: {}]
  %s3 = inlined_call_operand.vmem [shape: bf16[64,64], index: 3, kind: input, shape index: {}]
  %s4 = inlined_call_operand.vmem [shape: bf16[512,64], index: 4, kind: output, shape index: {}]
  %s5 = sld [smem:[#allocation0]]
  $region49: #{tpu_custom_call.1} parent=0
    _
  %s7 = ssub.s32 1, %s5
  %s8 = scalar_select 0, %s7, %s5
  loop: start=0, step=1, limit=4
  $region2: #{tpu_custom_call.1} parent=0 // loop_pre_header
    _
  $region3: #{tpu_custom_call.1} parent=0 // loop_header
    %s10 = sphi 0, %s14
    %p11 = scmp.ge.s32.totalorder %s10, 4
    %s20 = sphi 0, %s22
    %s23 = sphi 0, %s20
    %s24 = sphi 0, %s23
    %s40 = sphi 0, %s24
    %s46 = sphi 0, %s48
    %s49 = sphi 0, %s46
    %s50 = sphi 0, %s49
    %s66 = sphi 0, %s50
    %s70 = sphi 0, %s70
    %s72 = sphi 0, %s70
    %s73 = sphi 0, %s72
    %s87 = sphi 0, %s73
    %s91 = sphi 0, %s91
    %s93 = sphi 0, %s91
    %s94 = sphi 0, %s93
    %s108 = sphi 0, %s94
    %s114 = sphi 0, %s116
    %s117 = sphi 0, %s114
    %s118 = sphi 0, %s117
    %s134 = sphi 0, %s118
  $region4: #{tpu_custom_call.1} parent=0 // loop_header_branch
    %13 = sbr.rel (%p11) target = $region8
  $region5: #{tpu_custom_call.1} parent=0 // loop_body
    %s15 = ssub.s32 %s10, 1
    %s16 = ssub.s32 %s10, 2
    %s17 = sadd.s32 %s10, 1
    %s18 = ssub.s32 %s10, %s17
    %p19 = scmp.eq.s32.totalorder %s18, 0
    %s21 = sadd.s32 %s20, 1
    %s22 = scalar_select %p19, %s20, %s21
    %p25 = pneg %p19
    %p26 = scmp.eq.s32.totalorder %s10, 1
    %p27 = por %p25, %p26
    %p28 = scmp.ne.s32.totalorder %s20, %s23
    %p29 = scmp.eq.s32.totalorder %s10, 0
    %p30 = por %p28, %p29
    %p31 = scmp.ne.s32.totalorder %s20, %s23
    %p32 = scmp.eq.s32.totalorder %s15, 1
    %p33 = por %p31, %p32
    %p34 = scmp.ne.s32.totalorder %s23, %s24
    %p35 = scmp.eq.s32.totalorder %s15, 0
    %p36 = por %p34, %p35
    %p37 = scmp.ne.s32.totalorder %s23, %s24
    %p38 = scmp.eq.s32.totalorder %s16, 1
    %p39 = por %p37, %p38
    %p41 = scmp.ne.s32.totalorder %s24, %s40
    %p42 = scmp.eq.s32.totalorder %s16, 0
    %p43 = por %p41, %p42
    %s44 = ssub.s32 %s10, %s17
    %p45 = scmp.eq.s32.totalorder %s44, 0
    %s47 = sadd.s32 %s46, 1
    %s48 = scalar_select %p45, %s46, %s47
    %p51 = pneg %p45
    %p52 = scmp.eq.s32.totalorder %s10, 1
    %p53 = por %p51, %p52
    %p54 = scmp.ne.s32.totalorder %s46, %s49
    %p55 = scmp.eq.s32.totalorder %s10, 0
    %p56 = por %p54, %p55
    %p57 = scmp.ne.s32.totalorder %s46, %s49
    %p58 = scmp.eq.s32.totalorder %s15, 1
    %p59 = por %p57, %p58
    %p60 = scmp.ne.s32.totalorder %s49, %s50
    %p61 = scmp.eq.s32.totalorder %s15, 0
    %p62 = por %p60, %p61
    %p63 = scmp.ne.s32.totalorder %s49, %s50
    %p64 = scmp.eq.s32.totalorder %s16, 1
    %p65 = por %p63, %p64
    %p67 = scmp.ne.s32.totalorder %s50, %s66
    %p68 = scmp.eq.s32.totalorder %s16, 0
    %p69 = por %p67, %p68
    %s71 = sadd.s32 %s70, 1
    %p74 = scmp.eq.s32.totalorder %s10, 1
    %p75 = scmp.ne.s32.totalorder %s70, %s72
    %p76 = scmp.eq.s32.totalorder %s10, 0
    %p77 = por %p75, %p76
    %p78 = scmp.ne.s32.totalorder %s70, %s72
    %p79 = scmp.eq.s32.totalorder %s15, 1
    %p80 = por %p78, %p79
    %p81 = scmp.ne.s32.totalorder %s72, %s73
    %p82 = scmp.eq.s32.totalorder %s15, 0
    %p83 = por %p81, %p82
    %p84 = scmp.ne.s32.totalorder %s72, %s73
    %p85 = scmp.eq.s32.totalorder %s16, 1
    %p86 = por %p84, %p85
    %p88 = scmp.ne.s32.totalorder %s73, %s87
    %p89 = scmp.eq.s32.totalorder %s16, 0
    %p90 = por %p88, %p89
    %s92 = sadd.s32 %s91, 1
    %p95 = scmp.eq.s32.totalorder %s10, 1
    %p96 = scmp.ne.s32.totalorder %s91, %s93
    %p97 = scmp.eq.s32.totalorder %s10, 0
    %p98 = por %p96, %p97
    %p99 = scmp.ne.s32.totalorder %s91, %s93
    %p100 = scmp.eq.s32.totalorder %s15, 1
    %p101 = por %p99, %p100
    %p102 = scmp.ne.s32.totalorder %s93, %s94
    %p103 = scmp.eq.s32.totalorder %s15, 0
    %p104 = por %p102, %p103
    %p105 = scmp.ne.s32.totalorder %s93, %s94
    %p106 = scmp.eq.s32.totalorder %s16, 1
    %p107 = por %p105, %p106
    %p109 = scmp.ne.s32.totalorder %s94, %s108
    %p110 = scmp.eq.s32.totalorder %s16, 0
    %p111 = por %p109, %p110
    %s112 = ssub.s32 %s10, %s17
    %p113 = scmp.eq.s32.totalorder %s112, 0
    %s115 = sadd.s32 %s114, 1
    %s116 = scalar_select %p113, %s114, %s115
    %p119 = pneg %p113
    %p120 = scmp.eq.s32.totalorder %s10, 1
    %p121 = por %p119, %p120
    %p122 = scmp.ne.s32.totalorder %s114, %s117
    %p123 = scmp.eq.s32.totalorder %s10, 0
    %p124 = por %p122, %p123
    %p125 = scmp.ne.s32.totalorder %s114, %s117
    %p126 = scmp.eq.s32.totalorder %s15, 1
    %p127 = por %p125, %p126
    %p128 = scmp.ne.s32.totalorder %s117, %s118
    %p129 = scmp.eq.s32.totalorder %s15, 0
    %p130 = por %p128, %p129
    %p131 = scmp.ne.s32.totalorder %s117, %s118
    %p132 = scmp.eq.s32.totalorder %s16, 1
    %p133 = por %p131, %p132
    %p135 = scmp.ne.s32.totalorder %s118, %s134
    %p136 = scmp.eq.s32.totalorder %s16, 0
    %p137 = por %p135, %p136
    %p138 = scmp.le.s32.totalorder 1, %s10
    %p139 = scmp.lt.s32.totalorder %s10, 3
    %p140 = pnand %p138, %p139
    %p141 = pneg %p140
    // Predicated region
    $region9: #{tpu_custom_call.1} parent=5 // pred_check
      _
    $region10: #{tpu_custom_call.1} parent=5 // pred_check_branch
      %143 = sbr.rel (%p140) target = $region12
    $region11: #{tpu_custom_call.1} parent=5 // pred_region
      %s144 = ssub.s32 %s10, 1
      // Predicated region
      $region13: #{tpu_custom_call.1} parent=11 // pred_check
        %p145 = pneg %p83
      $region14: #{tpu_custom_call.1} parent=11 // pred_check_branch
        %147 = sbr.rel (%p145) target = $region16
      $region15: #{tpu_custom_call.1} parent=11 // pred_region
        _
      $region16: #{tpu_custom_call.1} parent=11 // pred_fallthru
        _
      // Predicated region
      $region17: #{tpu_custom_call.1} parent=11 // pred_check
        %p148 = pneg %p104
      $region18: #{tpu_custom_call.1} parent=11 // pred_check_branch
        %150 = sbr.rel (%p148) target = $region20
      $region19: #{tpu_custom_call.1} parent=11 // pred_region
        _
      $region20: #{tpu_custom_call.1} parent=11 // pred_fallthru
        _
    $region12: #{tpu_custom_call.1} parent=5 // pred_fallthru
      _
    %p151 = scmp.lt.s32.totalorder %s10, 2
    // Predicated region
    $region21: #{tpu_custom_call.1} parent=5 // pred_check
      %p152 = pneg %p151
    $region22: #{tpu_custom_call.1} parent=5 // pred_check_branch
      %154 = sbr.rel (%p152) target = $region24
    $region23: #{tpu_custom_call.1} parent=5 // pred_region
      // Predicated region
      $region25: #{tpu_custom_call.1} parent=23 // pred_check
        %p155 = pneg %p30
      $region26: #{tpu_custom_call.1} parent=23 // pred_check_branch
        %157 = sbr.rel (%p155) target = $region28
      $region27: #{tpu_custom_call.1} parent=23 // pred_region
        %s158 = smul.u32 32, %s10
        %p159 = scmp.lt.s32.totalorder %s158, 63
        %s160 = scalar_select %p159, %s158, 63
        %s161 = smul.addr %s160, 4
        %s162 = scalar_lea.vmem %s0, %s161
        %s163 = smul.u32 32, %s10
      $region28: #{tpu_custom_call.1} parent=23 // pred_fallthru
        _
      // Predicated region
      $region29: #{tpu_custom_call.1} parent=23 // pred_check
        %p164 = pneg %p56
      $region30: #{tpu_custom_call.1} parent=23 // pred_check_branch
        %166 = sbr.rel (%p164) target = $region32
      $region31: #{tpu_custom_call.1} parent=23 // pred_region
        %s167 = smul.u32 32, %s10
        %p168 = scmp.lt.s32.totalorder %s167, 63
        %s169 = scalar_select %p168, %s167, 63
        %s170 = smul.addr %s169, 8
        %s171 = scalar_lea.vmem %s1, %s170
        %s172 = smul.u32 32, %s10
      $region32: #{tpu_custom_call.1} parent=23 // pred_fallthru
        _
    $region24: #{tpu_custom_call.1} parent=5 // pred_fallthru
      _
    %p173 = scmp.le.s32.totalorder 1, %s10
    %p174 = scmp.lt.s32.totalorder %s10, 3
    %p175 = pnand %p173, %p174
    %p176 = pneg %p175
    // Predicated region
    $region33: #{tpu_custom_call.1} parent=5 // pred_check
      _
    $region34: #{tpu_custom_call.1} parent=5 // pred_check_branch
      %178 = sbr.rel (%p175) target = $region36
    $region35: #{tpu_custom_call.1} parent=5 // pred_region
      %s179 = ssub.s32 %s10, 1
      %s180 = smul.u32 32, %s15
      %p181 = scmp.lt.s32.totalorder %s180, 63
      %s182 = scalar_select %p181, %s180, 63
      %s183 = smul.addr %s182, 4
      %s184 = scalar_lea.vmem %s0, %s183
      %p185 = pneg %p36
      %p186 = pneg %p33
      %s187 = smul.u32 32, %s15
      %p188 = scmp.lt.s32.totalorder %s187, 63
      %s189 = scalar_select %p188, %s187, 63
      %s190 = smul.addr %s189, 8
      %s191 = scalar_lea.vmem %s1, %s190
      %p192 = pneg %p62
      %p193 = pneg %p59
      %p194 = pneg %p83
      %p195 = pneg %p80
      %p196 = pneg %p104
      %p197 = pneg %p101
      %p198 = pneg %p130
      %p199 = pneg %p127
      %s200 = smul.u32 32, %s15
      %p201 = scmp.lt.s32.totalorder %s200, 63
      %s202 = scalar_select %p201, %s200, 63
      %s203 = smul.addr %s202, 4
      %s204 = scalar_lea.vmem %s4, %s203
      %s205 = smul.u32 32, %s15
      %p206 = scmp.lt.s32.totalorder %s205, 63
      %s207 = scalar_select %p206, %s205, 63
      %s208 = smul.addr %s207, 4
      %s209 = scalar_lea.vmem %s0, %s208
      %s210 = smul.u32 32, %s15
      %s211 = smul.u32 32, %s15
      %p212 = scmp.lt.s32.totalorder %s211, 63
      %s213 = scalar_select %p212, %s211, 63
      %s214 = smul.addr %s213, 8
      %s215 = scalar_lea.vmem %s1, %s214
      %s216 = smul.u32 32, %s15
      %s217 = smul.u32 32, %s15
      %p218 = scmp.lt.s32.totalorder %s217, 63
      %s219 = scalar_select %p218, %s217, 63
      %s220 = smul.addr %s219, 4
      %s221 = scalar_lea.vmem %s4, %s220
      %s222 = smul.u32 32, %s15
      %v226 = vld [vmem:[%s215] sm:$0xff]
      %v227 = vld [vmem:[%s215 + $0x8] sm:$0xff]
      %v228 = vld [vmem:[%s215 + $0x10] sm:$0xff]
      %v229 = vld [vmem:[%s215 + $0x18] sm:$0xff]
      %v230 = vld [vmem:[%s215 + $0x20] sm:$0xff]
      %v231 = vld [vmem:[%s215 + $0x28] sm:$0xff]
      %v232 = vld [vmem:[%s215 + $0x30] sm:$0xff]
      %v233 = vld [vmem:[%s215 + $0x38] sm:$0xff]
      %v234 = vld [vmem:[%s215 + $0x40] sm:$0xff]
      %v235 = vld [vmem:[%s215 + $0x48] sm:$0xff]
      %v236 = vld [vmem:[%s215 + $0x50] sm:$0xff]
      %v237 = vld [vmem:[%s215 + $0x58] sm:$0xff]
      %v238 = vld [vmem:[%s215 + $0x60] sm:$0xff]
      %v239 = vld [vmem:[%s215 + $0x68] sm:$0xff]
      %v240 = vld [vmem:[%s215 + $0x70] sm:$0xff]
      %v241 = vld [vmem:[%s215 + $0x78] sm:$0xff]
      %v242 = vld [vmem:[%s215 + $0x80] sm:$0xff]
      %v243 = vld [vmem:[%s215 + $0x88] sm:$0xff]
      %v244 = vld [vmem:[%s215 + $0x90] sm:$0xff]
      %v245 = vld [vmem:[%s215 + $0x98] sm:$0xff]
      %v246 = vld [vmem:[%s215 + $0xa0] sm:$0xff]
      %v247 = vld [vmem:[%s215 + $0xa8] sm:$0xff]
      %v248 = vld [vmem:[%s215 + $0xb0] sm:$0xff]
      %v249 = vld [vmem:[%s215 + $0xb8] sm:$0xff]
      %v250 = vld [vmem:[%s215 + $0xc0] sm:$0xff]
      %v251 = vld [vmem:[%s215 + $0xc8] sm:$0xff]
      %v252 = vld [vmem:[%s215 + $0xd0] sm:$0xff]
      %v253 = vld [vmem:[%s215 + $0xd8] sm:$0xff]
      %v254 = vld [vmem:[%s215 + $0xe0] sm:$0xff]
      %v255 = vld [vmem:[%s215 + $0xe8] sm:$0xff]
      %v256 = vld [vmem:[%s215 + $0xf0] sm:$0xff]
      %v257 = vld [vmem:[%s215 + $0xf8] sm:$0xff]
      %vm258 = vcmp.gt.f32.partialorder %v226, 0.0
      %vm259 = vcmp.gt.f32.partialorder %v227, 0.0
      %vm260 = vcmp.gt.f32.partialorder %v228, 0.0
      %vm261 = vcmp.gt.f32.partialorder %v229, 0.0
      %vm262 = vcmp.gt.f32.partialorder %v230, 0.0
      %vm263 = vcmp.gt.f32.partialorder %v231, 0.0
      %vm264 = vcmp.gt.f32.partialorder %v232, 0.0
      %vm265 = vcmp.gt.f32.partialorder %v233, 0.0
      %vm266 = vcmp.gt.f32.partialorder %v234, 0.0
      %vm267 = vcmp.gt.f32.partialorder %v235, 0.0
      %vm268 = vcmp.gt.f32.partialorder %v236, 0.0
      %vm269 = vcmp.gt.f32.partialorder %v237, 0.0
      %vm270 = vcmp.gt.f32.partialorder %v238, 0.0
      %vm271 = vcmp.gt.f32.partialorder %v239, 0.0
      %vm272 = vcmp.gt.f32.partialorder %v240, 0.0
      %vm273 = vcmp.gt.f32.partialorder %v241, 0.0
      %vm274 = vcmp.gt.f32.partialorder %v242, 0.0
      %vm275 = vcmp.gt.f32.partialorder %v243, 0.0
      %vm276 = vcmp.gt.f32.partialorder %v244, 0.0
      %vm277 = vcmp.gt.f32.partialorder %v245, 0.0
      %vm278 = vcmp.gt.f32.partialorder %v246, 0.0
      %vm279 = vcmp.gt.f32.partialorder %v247, 0.0
      %vm280 = vcmp.gt.f32.partialorder %v248, 0.0
      %vm281 = vcmp.gt.f32.partialorder %v249, 0.0
      %vm282 = vcmp.gt.f32.partialorder %v250, 0.0
      %vm283 = vcmp.gt.f32.partialorder %v251, 0.0
      %vm284 = vcmp.gt.f32.partialorder %v252, 0.0
      %vm285 = vcmp.gt.f32.partialorder %v253, 0.0
      %vm286 = vcmp.gt.f32.partialorder %v254, 0.0
      %vm287 = vcmp.gt.f32.partialorder %v255, 0.0
      %vm288 = vcmp.gt.f32.partialorder %v256, 0.0
      %vm289 = vcmp.gt.f32.partialorder %v257, 0.0
      %v290 = vld [vmem:[%s2] sm:$0x1]
      %v291 = vld [vmem:[%s209] sm:$0xf]
      %v292 = vld [vmem:[%s209 + $0x4] sm:$0xf]
      %v293 = vld [vmem:[%s209 + $0x8] sm:$0xf]
      %v294 = vld [vmem:[%s209 + $0xc] sm:$0xf]
      %v295 = vld [vmem:[%s209 + $0x10] sm:$0xf]
      %v296 = vld [vmem:[%s209 + $0x14] sm:$0xf]
      %v297 = vld [vmem:[%s209 + $0x18] sm:$0xf]
      %v298 = vld [vmem:[%s209 + $0x1c] sm:$0xf]
      %v299 = vld [vmem:[%s209 + $0x20] sm:$0xf]
      %v300 = vld [vmem:[%s209 + $0x24] sm:$0xf]
      %v301 = vld [vmem:[%s209 + $0x28] sm:$0xf]
      %v302 = vld [vmem:[%s209 + $0x2c] sm:$0xf]
      %v303 = vld [vmem:[%s209 + $0x30] sm:$0xf]
      %v304 = vld [vmem:[%s209 + $0x34] sm:$0xf]
      %v305 = vld [vmem:[%s209 + $0x38] sm:$0xf]
      %v306 = vld [vmem:[%s209 + $0x3c] sm:$0xf]
      %v307 = vld [vmem:[%s209 + $0x40] sm:$0xf]
      %v308 = vld [vmem:[%s209 + $0x44] sm:$0xf]
      %v309 = vld [vmem:[%s209 + $0x48] sm:$0xf]
      %v310 = vld [vmem:[%s209 + $0x4c] sm:$0xf]
      %v311 = vld [vmem:[%s209 + $0x50] sm:$0xf]
      %v312 = vld [vmem:[%s209 + $0x54] sm:$0xf]
      %v313 = vld [vmem:[%s209 + $0x58] sm:$0xf]
      %v314 = vld [vmem:[%s209 + $0x5c] sm:$0xf]
      %v315 = vld [vmem:[%s209 + $0x60] sm:$0xf]
      %v316 = vld [vmem:[%s209 + $0x64] sm:$0xf]
      %v317 = vld [vmem:[%s209 + $0x68] sm:$0xf]
      %v318 = vld [vmem:[%s209 + $0x6c] sm:$0xf]
      %v319 = vld [vmem:[%s209 + $0x70] sm:$0xf]
      %v320 = vld [vmem:[%s209 + $0x74] sm:$0xf]
      %v321 = vld [vmem:[%s209 + $0x78] sm:$0xf]
      %v322 = vld [vmem:[%s209 + $0x7c] sm:$0xf]
      %v323 = vsel %vm258, 1, 0
      %v324 = vsel %vm259, 1, 0
      %v325 = vsel %vm260, 1, 0
      %v326 = vsel %vm261, 1, 0
      %v327 = vsel %vm262, 1, 0
      %v328 = vsel %vm263, 1, 0
      %v329 = vsel %vm264, 1, 0
      %v330 = vsel %vm265, 1, 0
      %v331 = vsel %vm266, 1, 0
      %v332 = vsel %vm267, 1, 0
      %v333 = vsel %vm268, 1, 0
      %v334 = vsel %vm269, 1, 0
      %v335 = vsel %vm270, 1, 0
      %v336 = vsel %vm271, 1, 0
      %v337 = vsel %vm272, 1, 0
      %v338 = vsel %vm273, 1, 0
      %v339 = vsel %vm274, 1, 0
      %v340 = vsel %vm275, 1, 0
      %v341 = vsel %vm276, 1, 0
      %v342 = vsel %vm277, 1, 0
      %v343 = vsel %vm278, 1, 0
      %v344 = vsel %vm279, 1, 0
      %v345 = vsel %vm280, 1, 0
      %v346 = vsel %vm281, 1, 0
      %v347 = vsel %vm282, 1, 0
      %v348 = vsel %vm283, 1, 0
      %v349 = vsel %vm284, 1, 0
      %v350 = vsel %vm285, 1, 0
      %v351 = vsel %vm286, 1, 0
      %v352 = vsel %vm287, 1, 0
      %v353 = vsel %vm288, 1, 0
      %v354 = vsel %vm289, 1, 0
      %355 = vset.pattern.permute.xlu0 0
      %356 = vperm.xlu0 %355, %v323
      %v357 = vpop.permute.xlu0 %356
      %358 = vset.pattern.permute.xlu0 0
      %359 = vperm.xlu0 %358, %v324
      %v360 = vpop.permute.xlu0 %359
      %361 = vset.pattern.permute.xlu0 0
      %362 = vperm.xlu0 %361, %v325
      %v363 = vpop.permute.xlu0 %362
      %364 = vset.pattern.permute.xlu0 0
      %365 = vperm.xlu0 %364, %v326
      %v366 = vpop.permute.xlu0 %365
      %367 = vset.pattern.permute.xlu0 0
      %368 = vperm.xlu0 %367, %v327
      %v369 = vpop.permute.xlu0 %368
      %370 = vset.pattern.permute.xlu0 0
      %371 = vperm.xlu0 %370, %v328
      %v372 = vpop.permute.xlu0 %371
      %373 = vset.pattern.permute.xlu0 0
      %374 = vperm.xlu0 %373, %v329
      %v375 = vpop.permute.xlu0 %374
      %376 = vset.pattern.permute.xlu0 0
      %377 = vperm.xlu0 %376, %v330
      %v378 = vpop.permute.xlu0 %377
      %379 = vset.pattern.permute.xlu0 0
      %380 = vperm.xlu0 %379, %v331
      %v381 = vpop.permute.xlu0 %380
      %382 = vset.pattern.permute.xlu0 0
      %383 = vperm.xlu0 %382, %v332
      %v384 = vpop.permute.xlu0 %383
      %385 = vset.pattern.permute.xlu0 0
      %386 = vperm.xlu0 %385, %v333
      %v387 = vpop.permute.xlu0 %386
      %388 = vset.pattern.permute.xlu0 0
      %389 = vperm.xlu0 %388, %v334
      %v390 = vpop.permute.xlu0 %389
      %391 = vset.pattern.permute.xlu0 0
      %392 = vperm.xlu0 %391, %v335
      %v393 = vpop.permute.xlu0 %392
      %394 = vset.pattern.permute.xlu0 0
      %395 = vperm.xlu0 %394, %v336
      %v396 = vpop.permute.xlu0 %395
      %397 = vset.pattern.permute.xlu0 0
      %398 = vperm.xlu0 %397, %v337
      %v399 = vpop.permute.xlu0 %398
      %400 = vset.pattern.permute.xlu0 0
      %401 = vperm.xlu0 %400, %v338
      %v402 = vpop.permute.xlu0 %401
      %403 = vset.pattern.permute.xlu0 0
      %404 = vperm.xlu0 %403, %v339
      %v405 = vpop.permute.xlu0 %404
      %406 = vset.pattern.permute.xlu0 0
      %407 = vperm.xlu0 %406, %v340
      %v408 = vpop.permute.xlu0 %407
      %409 = vset.pattern.permute.xlu0 0
      %410 = vperm.xlu0 %409, %v341
      %v411 = vpop.permute.xlu0 %410
      %412 = vset.pattern.permute.xlu0 0
      %413 = vperm.xlu0 %412, %v342
      %v414 = vpop.permute.xlu0 %413
      %415 = vset.pattern.permute.xlu0 0
      %416 = vperm.xlu0 %415, %v343
      %v417 = vpop.permute.xlu0 %416
      %418 = vset.pattern.permute.xlu0 0
      %419 = vperm.xlu0 %418, %v344
      %v420 = vpop.permute.xlu0 %419
      %421 = vset.pattern.permute.xlu0 0
      %422 = vperm.xlu0 %421, %v345
      %v423 = vpop.permute.xlu0 %422
      %424 = vset.pattern.permute.xlu0 0
      %425 = vperm.xlu0 %424, %v346
      %v426 = vpop.permute.xlu0 %425
      %427 = vset.pattern.permute.xlu0 0
      %428 = vperm.xlu0 %427, %v347
      %v429 = vpop.permute.xlu0 %428
      %430 = vset.pattern.permute.xlu0 0
      %431 = vperm.xlu0 %430, %v348
      %v432 = vpop.permute.xlu0 %431
      %433 = vset.pattern.permute.xlu0 0
      %434 = vperm.xlu0 %433, %v349
      %v435 = vpop.permute.xlu0 %434
      %436 = vset.pattern.permute.xlu0 0
      %437 = vperm.xlu0 %436, %v350
      %v438 = vpop.permute.xlu0 %437
      %439 = vset.pattern.permute.xlu0 0
      %440 = vperm.xlu0 %439, %v351
      %v441 = vpop.permute.xlu0 %440
      %442 = vset.pattern.permute.xlu0 0
      %443 = vperm.xlu0 %442, %v352
      %v444 = vpop.permute.xlu0 %443
      %445 = vset.pattern.permute.xlu0 0
      %446 = vperm.xlu0 %445, %v353
      %v447 = vpop.permute.xlu0 %446
      %448 = vset.pattern.permute.xlu0 0
      %449 = vperm.xlu0 %448, %v354
      %v450 = vpop.permute.xlu0 %449
      %vm451 = vcmp.eq.s32.totalorder %v357, 1
      %vm452 = vcmp.eq.s32.totalorder %v360, 1
      %vm453 = vcmp.eq.s32.totalorder %v363, 1
      %vm454 = vcmp.eq.s32.totalorder %v366, 1
      %vm455 = vcmp.eq.s32.totalorder %v369, 1
      %vm456 = vcmp.eq.s32.totalorder %v372, 1
      %vm457 = vcmp.eq.s32.totalorder %v375, 1
      %vm458 = vcmp.eq.s32.totalorder %v378, 1
      %vm459 = vcmp.eq.s32.totalorder %v381, 1
      %vm460 = vcmp.eq.s32.totalorder %v384, 1
      %vm461 = vcmp.eq.s32.totalorder %v387, 1
      %vm462 = vcmp.eq.s32.totalorder %v390, 1
      %vm463 = vcmp.eq.s32.totalorder %v393, 1
      %vm464 = vcmp.eq.s32.totalorder %v396, 1
      %vm465 = vcmp.eq.s32.totalorder %v399, 1
      %vm466 = vcmp.eq.s32.totalorder %v402, 1
      %vm467 = vcmp.eq.s32.totalorder %v405, 1
      %vm468 = vcmp.eq.s32.totalorder %v408, 1
      %vm469 = vcmp.eq.s32.totalorder %v411, 1
      %vm470 = vcmp.eq.s32.totalorder %v414, 1
      %vm471 = vcmp.eq.s32.totalorder %v417, 1
      %vm472 = vcmp.eq.s32.totalorder %v420, 1
      %vm473 = vcmp.eq.s32.totalorder %v423, 1
      %vm474 = vcmp.eq.s32.totalorder %v426, 1
      %vm475 = vcmp.eq.s32.totalorder %v429, 1
      %vm476 = vcmp.eq.s32.totalorder %v432, 1
      %vm477 = vcmp.eq.s32.totalorder %v435, 1
      %vm478 = vcmp.eq.s32.totalorder %v438, 1
      %vm479 = vcmp.eq.s32.totalorder %v441, 1
      %vm480 = vcmp.eq.s32.totalorder %v444, 1
      %vm481 = vcmp.eq.s32.totalorder %v447, 1
      %vm482 = vcmp.eq.s32.totalorder %v450, 1
      %v484 = vpack.i.b16 %v290, %v290
      %v486 = vperm.slane %v484, 0
      %vm487 = vmpackc.low %vm451, %vm451
      %vm488 = vmpackc.low %vm452, %vm452
      %vm489 = vmpackc.low %vm453, %vm453
      %vm490 = vmpackc.low %vm454, %vm454
      %vm491 = vmpackc.low %vm455, %vm455
      %vm492 = vmpackc.low %vm456, %vm456
      %vm493 = vmpackc.low %vm457, %vm457
      %vm494 = vmpackc.low %vm458, %vm458
      %vm495 = vmpackc.low %vm459, %vm459
      %vm496 = vmpackc.low %vm460, %vm460
      %vm497 = vmpackc.low %vm461, %vm461
      %vm498 = vmpackc.low %vm462, %vm462
      %vm499 = vmpackc.low %vm463, %vm463
      %vm500 = vmpackc.low %vm464, %vm464
      %vm501 = vmpackc.low %vm465, %vm465
      %vm502 = vmpackc.low %vm466, %vm466
      %vm503 = vmpackc.low %vm467, %vm467
      %vm504 = vmpackc.low %vm468, %vm468
      %vm505 = vmpackc.low %vm469, %vm469
      %vm506 = vmpackc.low %vm470, %vm470
      %vm507 = vmpackc.low %vm471, %vm471
      %vm508 = vmpackc.low %vm472, %vm472
      %vm509 = vmpackc.low %vm473, %vm473
      %vm510 = vmpackc.low %vm474, %vm474
      %vm511 = vmpackc.low %vm475, %vm475
      %vm512 = vmpackc.low %vm476, %vm476
      %vm513 = vmpackc.low %vm477, %vm477
      %vm514 = vmpackc.low %vm478, %vm478
      %vm515 = vmpackc.low %vm479, %vm479
      %vm516 = vmpackc.low %vm480, %vm480
      %vm517 = vmpackc.low %vm481, %vm481
      %vm518 = vmpackc.low %vm482, %vm482
      %v519 = vsel %vm487, 65537, 0
      %v520 = vsel %vm488, 65537, 0
      %v521 = vsel %vm489, 65537, 0
      %v522 = vsel %vm490, 65537, 0
      %v523 = vsel %vm491, 65537, 0
      %v524 = vsel %vm492, 65537, 0
      %v525 = vsel %vm493, 65537, 0
      %v526 = vsel %vm494, 65537, 0
      %v527 = vsel %vm495, 65537, 0
      %v528 = vsel %vm496, 65537, 0
      %v529 = vsel %vm497, 65537, 0
      %v530 = vsel %vm498, 65537, 0
      %v531 = vsel %vm499, 65537, 0
      %v532 = vsel %vm500, 65537, 0
      %v533 = vsel %vm501, 65537, 0
      %v534 = vsel %vm502, 65537, 0
      %v535 = vsel %vm503, 65537, 0
      %v536 = vsel %vm504, 65537, 0
      %v537 = vsel %vm505, 65537, 0
      %v538 = vsel %vm506, 65537, 0
      %v539 = vsel %vm507, 65537, 0
      %v540 = vsel %vm508, 65537, 0
      %v541 = vsel %vm509, 65537, 0
      %v542 = vsel %vm510, 65537, 0
      %v543 = vsel %vm511, 65537, 0
      %v544 = vsel %vm512, 65537, 0
      %v545 = vsel %vm513, 65537, 0
      %v546 = vsel %vm514, 65537, 0
      %v547 = vsel %vm515, 65537, 0
      %v548 = vsel %vm516, 65537, 0
      %v549 = vsel %vm517, 65537, 0
      %v550 = vsel %vm518, 65537, 0
      %v551 = vunpack.c.l.b16 %v519
      %v552 = vunpack.c.l.b16 %v520
      %v553 = vunpack.c.l.b16 %v521
      %v554 = vunpack.c.l.b16 %v522
      %v555 = vunpack.c.l.b16 %v523
      %v556 = vunpack.c.l.b16 %v524
      %v557 = vunpack.c.l.b16 %v525
      %v558 = vunpack.c.l.b16 %v526
      %v559 = vunpack.c.l.b16 %v527
      %v560 = vunpack.c.l.b16 %v528
      %v561 = vunpack.c.l.b16 %v529
      %v562 = vunpack.c.l.b16 %v530
      %v563 = vunpack.c.l.b16 %v531
      %v564 = vunpack.c.l.b16 %v532
      %v565 = vunpack.c.l.b16 %v533
      %v566 = vunpack.c.l.b16 %v534
      %v567 = vunpack.c.l.b16 %v535
      %v568 = vunpack.c.l.b16 %v536
      %v569 = vunpack.c.l.b16 %v537
      %v570 = vunpack.c.l.b16 %v538
      %v571 = vunpack.c.l.b16 %v539
      %v572 = vunpack.c.l.b16 %v540
      %v573 = vunpack.c.l.b16 %v541
      %v574 = vunpack.c.l.b16 %v542
      %v575 = vunpack.c.l.b16 %v543
      %v576 = vunpack.c.l.b16 %v544
      %v577 = vunpack.c.l.b16 %v545
      %v578 = vunpack.c.l.b16 %v546
      %v579 = vunpack.c.l.b16 %v547
      %v580 = vunpack.c.l.b16 %v548
      %v581 = vunpack.c.l.b16 %v549
      %v582 = vunpack.c.l.b16 %v550
      %v583 = vpack.c.b16 %v552, %v551
      %v584 = vpack.c.b16 %v554, %v553
      %v585 = vpack.c.b16 %v556, %v555
      %v586 = vpack.c.b16 %v558, %v557
      %v587 = vpack.c.b16 %v560, %v559
      %v588 = vpack.c.b16 %v562, %v561
      %v589 = vpack.c.b16 %v564, %v563
      %v590 = vpack.c.b16 %v566, %v565
      %v591 = vpack.c.b16 %v568, %v567
      %v592 = vpack.c.b16 %v570, %v569
      %v593 = vpack.c.b16 %v572, %v571
      %v594 = vpack.c.b16 %v574, %v573
      %v595 = vpack.c.b16 %v576, %v575
      %v596 = vpack.c.b16 %v578, %v577
      %v597 = vpack.c.b16 %v580, %v579
      %v598 = vpack.c.b16 %v582, %v581
      %v599 = vunpack.c.l.b16 %v583
      %v600 = vunpack.c.h.b16 %v583
      %v601 = vunpack.c.l.b16 0
      %v602 = vunpack.c.h.b16 0
      %vm603 = vcmp.ne.s32.totalorder %v599, %v601
      %vm604 = vcmp.ne.s32.totalorder %v600, %v602
      %vm605 = vmpackc.low %vm604, %vm603
      %v606 = vunpack.c.l.b16 %v584
      %v607 = vunpack.c.h.b16 %v584
      %v608 = vunpack.c.l.b16 0
      %v609 = vunpack.c.h.b16 0
      %vm610 = vcmp.ne.s32.totalorder %v606, %v608
      %vm611 = vcmp.ne.s32.totalorder %v607, %v609
      %vm612 = vmpackc.low %vm611, %vm610
      %v613 = vunpack.c.l.b16 %v585
      %v614 = vunpack.c.h.b16 %v585
      %v615 = vunpack.c.l.b16 0
      %v616 = vunpack.c.h.b16 0
      %vm617 = vcmp.ne.s32.totalorder %v613, %v615
      %vm618 = vcmp.ne.s32.totalorder %v614, %v616
      %vm619 = vmpackc.low %vm618, %vm617
      %v620 = vunpack.c.l.b16 %v586
      %v621 = vunpack.c.h.b16 %v586
      %v622 = vunpack.c.l.b16 0
      %v623 = vunpack.c.h.b16 0
      %vm624 = vcmp.ne.s32.totalorder %v620, %v622
      %vm625 = vcmp.ne.s32.totalorder %v621, %v623
      %vm626 = vmpackc.low %vm625, %vm624
      %v627 = vunpack.c.l.b16 %v587
      %v628 = vunpack.c.h.b16 %v587
      %v629 = vunpack.c.l.b16 0
      %v630 = vunpack.c.h.b16 0
      %vm631 = vcmp.ne.s32.totalorder %v627, %v629
      %vm632 = vcmp.ne.s32.totalorder %v628, %v630
      %vm633 = vmpackc.low %vm632, %vm631
      %v634 = vunpack.c.l.b16 %v588
      %v635 = vunpack.c.h.b16 %v588
      %v636 = vunpack.c.l.b16 0
      %v637 = vunpack.c.h.b16 0
      %vm638 = vcmp.ne.s32.totalorder %v634, %v636
      %vm639 = vcmp.ne.s32.totalorder %v635, %v637
      %vm640 = vmpackc.low %vm639, %vm638
      %v641 = vunpack.c.l.b16 %v589
      %v642 = vunpack.c.h.b16 %v589
      %v643 = vunpack.c.l.b16 0
      %v644 = vunpack.c.h.b16 0
      %vm645 = vcmp.ne.s32.totalorder %v641, %v643
      %vm646 = vcmp.ne.s32.totalorder %v642, %v644
      %vm647 = vmpackc.low %vm646, %vm645
      %v648 = vunpack.c.l.b16 %v590
      %v649 = vunpack.c.h.b16 %v590
      %v650 = vunpack.c.l.b16 0
      %v651 = vunpack.c.h.b16 0
      %vm652 = vcmp.ne.s32.totalorder %v648, %v650
      %vm653 = vcmp.ne.s32.totalorder %v649, %v651
      %vm654 = vmpackc.low %vm653, %vm652
      %v655 = vunpack.c.l.b16 %v591
      %v656 = vunpack.c.h.b16 %v591
      %v657 = vunpack.c.l.b16 0
      %v658 = vunpack.c.h.b16 0
      %vm659 = vcmp.ne.s32.totalorder %v655, %v657
      %vm660 = vcmp.ne.s32.totalorder %v656, %v658
      %vm661 = vmpackc.low %vm660, %vm659
      %v662 = vunpack.c.l.b16 %v592
      %v663 = vunpack.c.h.b16 %v592
      %v664 = vunpack.c.l.b16 0
      %v665 = vunpack.c.h.b16 0
      %vm666 = vcmp.ne.s32.totalorder %v662, %v664
      %vm667 = vcmp.ne.s32.totalorder %v663, %v665
      %vm668 = vmpackc.low %vm667, %vm666
      %v669 = vunpack.c.l.b16 %v593
      %v670 = vunpack.c.h.b16 %v593
      %v671 = vunpack.c.l.b16 0
      %v672 = vunpack.c.h.b16 0
      %vm673 = vcmp.ne.s32.totalorder %v669, %v671
      %vm674 = vcmp.ne.s32.totalorder %v670, %v672
      %vm675 = vmpackc.low %vm674, %vm673
      %v676 = vunpack.c.l.b16 %v594
      %v677 = vunpack.c.h.b16 %v594
      %v678 = vunpack.c.l.b16 0
      %v679 = vunpack.c.h.b16 0
      %vm680 = vcmp.ne.s32.totalorder %v676, %v678
      %vm681 = vcmp.ne.s32.totalorder %v677, %v679
      %vm682 = vmpackc.low %vm681, %vm680
      %v683 = vunpack.c.l.b16 %v595
      %v684 = vunpack.c.h.b16 %v595
      %v685 = vunpack.c.l.b16 0
      %v686 = vunpack.c.h.b16 0
      %vm687 = vcmp.ne.s32.totalorder %v683, %v685
      %vm688 = vcmp.ne.s32.totalorder %v684, %v686
      %vm689 = vmpackc.low %vm688, %vm687
      %v690 = vunpack.c.l.b16 %v596
      %v691 = vunpack.c.h.b16 %v596
      %v692 = vunpack.c.l.b16 0
      %v693 = vunpack.c.h.b16 0
      %vm694 = vcmp.ne.s32.totalorder %v690, %v692
      %vm695 = vcmp.ne.s32.totalorder %v691, %v693
      %vm696 = vmpackc.low %vm695, %vm694
      %v697 = vunpack.c.l.b16 %v597
      %v698 = vunpack.c.h.b16 %v597
      %v699 = vunpack.c.l.b16 0
      %v700 = vunpack.c.h.b16 0
      %vm701 = vcmp.ne.s32.totalorder %v697, %v699
      %vm702 = vcmp.ne.s32.totalorder %v698, %v700
      %vm703 = vmpackc.low %vm702, %vm701
      %v704 = vunpack.c.l.b16 %v598
      %v705 = vunpack.c.h.b16 %v598
      %v706 = vunpack.c.l.b16 0
      %v707 = vunpack.c.h.b16 0
      %vm708 = vcmp.ne.s32.totalorder %v704, %v706
      %vm709 = vcmp.ne.s32.totalorder %v705, %v707
      %vm710 = vmpackc.low %vm709, %vm708
      %v743 = vunpack.c.l.b16 %v291
      %v744 = vunpack.c.l.b16 %v292
      %v745 = vunpack.c.l.b16 %v293
      %v746 = vunpack.c.l.b16 %v294
      %v747 = vunpack.c.l.b16 %v295
      %v748 = vunpack.c.l.b16 %v296
      %v749 = vunpack.c.l.b16 %v297
      %v750 = vunpack.c.l.b16 %v298
      %v751 = vunpack.c.l.b16 %v299
      %v752 = vunpack.c.l.b16 %v300
      %v753 = vunpack.c.l.b16 %v301
      %v754 = vunpack.c.l.b16 %v302
      %v755 = vunpack.c.l.b16 %v303
      %v756 = vunpack.c.l.b16 %v304
      %v757 = vunpack.c.l.b16 %v305
      %v758 = vunpack.c.l.b16 %v306
      %v759 = vunpack.c.l.b16 %v307
      %v760 = vunpack.c.l.b16 %v308
      %v761 = vunpack.c.l.b16 %v309
      %v762 = vunpack.c.l.b16 %v310
      %v763 = vunpack.c.l.b16 %v311
      %v764 = vunpack.c.l.b16 %v312
      %v765 = vunpack.c.l.b16 %v313
      %v766 = vunpack.c.l.b16 %v314
      %v767 = vunpack.c.l.b16 %v315
      %v768 = vunpack.c.l.b16 %v316
      %v769 = vunpack.c.l.b16 %v317
      %v770 = vunpack.c.l.b16 %v318
      %v771 = vunpack.c.l.b16 %v319
      %v772 = vunpack.c.l.b16 %v320
      %v773 = vunpack.c.l.b16 %v321
      %v774 = vunpack.c.l.b16 %v322
      %v775 = vpack.c.b16 %v744, %v743
      %v776 = vpack.c.b16 %v746, %v745
      %v777 = vpack.c.b16 %v748, %v747
      %v778 = vpack.c.b16 %v750, %v749
      %v779 = vpack.c.b16 %v752, %v751
      %v780 = vpack.c.b16 %v754, %v753
      %v781 = vpack.c.b16 %v756, %v755
      %v782 = vpack.c.b16 %v758, %v757
      %v783 = vpack.c.b16 %v760, %v759
      %v784 = vpack.c.b16 %v762, %v761
      %v785 = vpack.c.b16 %v764, %v763
      %v786 = vpack.c.b16 %v766, %v765
      %v787 = vpack.c.b16 %v768, %v767
      %v788 = vpack.c.b16 %v770, %v769
      %v789 = vpack.c.b16 %v772, %v771
      %v790 = vpack.c.b16 %v774, %v773
      %v807 = vsel %vm605, %v486, %v775
      %v808 = vsel %vm612, %v486, %v776
      %v809 = vsel %vm619, %v486, %v777
      %v810 = vsel %vm626, %v486, %v778
      %v811 = vsel %vm633, %v486, %v779
      %v812 = vsel %vm640, %v486, %v780
      %v813 = vsel %vm647, %v486, %v781
      %v814 = vsel %vm654, %v486, %v782
      %v815 = vsel %vm661, %v486, %v783
      %v816 = vsel %vm668, %v486, %v784
      %v817 = vsel %vm675, %v486, %v785
      %v818 = vsel %vm682, %v486, %v786
      %v819 = vsel %vm689, %v486, %v787
      %v820 = vsel %vm696, %v486, %v788
      %v821 = vsel %vm703, %v486, %v789
      %v822 = vsel %vm710, %v486, %v790
      %v823 = vld [vmem:[%s3] sm:$0xf]
      %v824 = vld [vmem:[%s3 + $0x4] sm:$0xf]
      %v825 = vld [vmem:[%s3 + $0x8] sm:$0xf]
      %v826 = vld [vmem:[%s3 + $0xc] sm:$0xf]
      %v827 = vld [vmem:[%s3 + $0x10] sm:$0xf]
      %v828 = vld [vmem:[%s3 + $0x14] sm:$0xf]
      %v829 = vld [vmem:[%s3 + $0x18] sm:$0xf]
      %v830 = vld [vmem:[%s3 + $0x1c] sm:$0xf]
      %v839 = vunpack.c.l.b16 %v823
      %v840 = vunpack.c.l.b16 %v824
      %v841 = vunpack.c.l.b16 %v825
      %v842 = vunpack.c.l.b16 %v826
      %v843 = vunpack.c.l.b16 %v827
      %v844 = vunpack.c.l.b16 %v828
      %v845 = vunpack.c.l.b16 %v829
      %v846 = vunpack.c.l.b16 %v830
      %v847 = vpack.c.b16 %v840, %v839
      %v848 = vpack.c.b16 %v842, %v841
      %v849 = vpack.c.b16 %v844, %v843
      %v850 = vpack.c.b16 %v846, %v845
      %vm855 = vcmask 523264
      %v857 = vsel %vm855, %v807, 0
      %v860 = vsel %vm855, %v808, 0
      %v863 = vsel %vm855, %v809, 0
      %v866 = vsel %vm855, %v810, 0
      %v869 = vsel %vm855, %v811, 0
      %v872 = vsel %vm855, %v812, 0
      %v875 = vsel %vm855, %v813, 0
      %v878 = vsel %vm855, %v814, 0
      %v881 = vsel %vm855, %v815, 0
      %v884 = vsel %vm855, %v816, 0
      %v887 = vsel %vm855, %v817, 0
      %v890 = vsel %vm855, %v818, 0
      %v893 = vsel %vm855, %v819, 0
      %v896 = vsel %vm855, %v820, 0
      %v899 = vsel %vm855, %v821, 0
      %v902 = vsel %vm855, %v822, 0
      %904 = vmatpush.bf16.msra.mxu0 0
      %905 = vmatpush.bf16.msra.mxu0 0
      %906 = vmatpush.bf16.msra.mxu0 0
      %907 = vmatpush.bf16.msra.mxu0 0
      %908 = vmatpush.bf16.msra.mxu0 %v850
      %909 = vmatpush.bf16.msra.mxu0 %v849
      %910 = vmatpush.bf16.msra.mxu0 %v848
      %911 = vmatpush.bf16.msra.mxu0 %v847
      %912 = vmatmul.bf16.gmra.mxu0 %v857
      %v913 = vpop.f32.mrf.mxu0
      %v914 = vadd.f32 0.0, %v913
      %v915 = vpop.f32.mrf.mxu0
      %v916 = vadd.f32 0.0, %v915
      %917 = vmatmul.bf16.gmra.mxu0 %v860
      %v918 = vpop.f32.mrf.mxu0
      %v919 = vadd.f32 0.0, %v918
      %v920 = vpop.f32.mrf.mxu0
      %v921 = vadd.f32 0.0, %v920
      %922 = vmatmul.bf16.gmra.mxu0 %v863
      %v923 = vpop.f32.mrf.mxu0
      %v924 = vadd.f32 0.0, %v923
      %v925 = vpop.f32.mrf.mxu0
      %v926 = vadd.f32 0.0, %v925
      %927 = vmatmul.bf16.gmra.mxu0 %v866
      %v928 = vpop.f32.mrf.mxu0
      %v929 = vadd.f32 0.0, %v928
      %v930 = vpop.f32.mrf.mxu0
      %v931 = vadd.f32 0.0, %v930
      %932 = vmatmul.bf16.gmra.mxu0 %v869
      %v933 = vpop.f32.mrf.mxu0
      %v934 = vadd.f32 0.0, %v933
      %v935 = vpop.f32.mrf.mxu0
      %v936 = vadd.f32 0.0, %v935
      %937 = vmatmul.bf16.gmra.mxu0 %v872
      %v938 = vpop.f32.mrf.mxu0
      %v939 = vadd.f32 0.0, %v938
      %v940 = vpop.f32.mrf.mxu0
      %v941 = vadd.f32 0.0, %v940
      %942 = vmatmul.bf16.gmra.mxu0 %v875
      %v943 = vpop.f32.mrf.mxu0
      %v944 = vadd.f32 0.0, %v943
      %v945 = vpop.f32.mrf.mxu0
      %v946 = vadd.f32 0.0, %v945
      %947 = vmatmul.bf16.gmra.mxu0 %v878
      %v948 = vpop.f32.mrf.mxu0
      %v949 = vadd.f32 0.0, %v948
      %v950 = vpop.f32.mrf.mxu0
      %v951 = vadd.f32 0.0, %v950
      %952 = vmatmul.bf16.gmra.mxu0 %v881
      %v953 = vpop.f32.mrf.mxu0
      %v954 = vadd.f32 0.0, %v953
      %v955 = vpop.f32.mrf.mxu0
      %v956 = vadd.f32 0.0, %v955
      %957 = vmatmul.bf16.gmra.mxu0 %v884
      %v958 = vpop.f32.mrf.mxu0
      %v959 = vadd.f32 0.0, %v958
      %v960 = vpop.f32.mrf.mxu0
      %v961 = vadd.f32 0.0, %v960
      %962 = vmatmul.bf16.gmra.mxu0 %v887
      %v963 = vpop.f32.mrf.mxu0
      %v964 = vadd.f32 0.0, %v963
      %v965 = vpop.f32.mrf.mxu0
      %v966 = vadd.f32 0.0, %v965
      %967 = vmatmul.bf16.gmra.mxu0 %v890
      %v968 = vpop.f32.mrf.mxu0
      %v969 = vadd.f32 0.0, %v968
      %v970 = vpop.f32.mrf.mxu0
      %v971 = vadd.f32 0.0, %v970
      %972 = vmatmul.bf16.gmra.mxu0 %v893
      %v973 = vpop.f32.mrf.mxu0
      %v974 = vadd.f32 0.0, %v973
      %v975 = vpop.f32.mrf.mxu0
      %v976 = vadd.f32 0.0, %v975
      %977 = vmatmul.bf16.gmra.mxu0 %v896
      %v978 = vpop.f32.mrf.mxu0
      %v979 = vadd.f32 0.0, %v978
      %v980 = vpop.f32.mrf.mxu0
      %v981 = vadd.f32 0.0, %v980
      %982 = vmatmul.bf16.gmra.mxu0 %v899
      %v983 = vpop.f32.mrf.mxu0
      %v984 = vadd.f32 0.0, %v983
      %v985 = vpop.f32.mrf.mxu0
      %v986 = vadd.f32 0.0, %v985
      %987 = vmatmul.bf16.gmra.mxu0 %v902
      %v988 = vpop.f32.mrf.mxu0
      %v989 = vadd.f32 0.0, %v988
      %v990 = vpop.f32.mrf.mxu0
      %v991 = vadd.f32 0.0, %v990
      %992 = vdwg.mxu0
      %v993 = vpack.c.bf16 %v914, %v914
      %v994 = vpack.c.bf16 %v916, %v916
      %v995 = vpack.c.bf16 %v919, %v919
      %v996 = vpack.c.bf16 %v921, %v921
      %v997 = vpack.c.bf16 %v924, %v924
      %v998 = vpack.c.bf16 %v926, %v926
      %v999 = vpack.c.bf16 %v929, %v929
      %v1000 = vpack.c.bf16 %v931, %v931
      %v1001 = vpack.c.bf16 %v934, %v934
      %v1002 = vpack.c.bf16 %v936, %v936
      %v1003 = vpack.c.bf16 %v939, %v939
      %v1004 = vpack.c.bf16 %v941, %v941
      %v1005 = vpack.c.bf16 %v944, %v944
      %v1006 = vpack.c.bf16 %v946, %v946
      %v1007 = vpack.c.bf16 %v949, %v949
      %v1008 = vpack.c.bf16 %v951, %v951
      %v1009 = vpack.c.bf16 %v954, %v954
      %v1010 = vpack.c.bf16 %v956, %v956
      %v1011 = vpack.c.bf16 %v959, %v959
      %v1012 = vpack.c.bf16 %v961, %v961
      %v1013 = vpack.c.bf16 %v964, %v964
      %v1014 = vpack.c.bf16 %v966, %v966
      %v1015 = vpack.c.bf16 %v969, %v969
      %v1016 = vpack.c.bf16 %v971, %v971
      %v1017 = vpack.c.bf16 %v974, %v974
      %v1018 = vpack.c.bf16 %v976, %v976
      %v1019 = vpack.c.bf16 %v979, %v979
      %v1020 = vpack.c.bf16 %v981, %v981
      %v1021 = vpack.c.bf16 %v984, %v984
      %v1022 = vpack.c.bf16 %v986, %v986
      %v1023 = vpack.c.bf16 %v989, %v989
      %v1024 = vpack.c.bf16 %v991, %v991
      %vm1025 = vcmask 519168
      %1026 = vst.msk [vmem:[%s221] sm:$0xf] %vm1025, %v993
      %1027 = vst.msk [vmem:[%s221 + $0x4] sm:$0xf] %vm1025, %v994
      %1028 = vst.msk [vmem:[%s221 + $0x8] sm:$0xf] %vm1025, %v995
      %1029 = vst.msk [vmem:[%s221 + $0xc] sm:$0xf] %vm1025, %v996
      %1030 = vst.msk [vmem:[%s221 + $0x10] sm:$0xf] %vm1025, %v997
      %1031 = vst.msk [vmem:[%s221 + $0x14] sm:$0xf] %vm1025, %v998
      %1032 = vst.msk [vmem:[%s221 + $0x18] sm:$0xf] %vm1025, %v999
      %1033 = vst.msk [vmem:[%s221 + $0x1c] sm:$0xf] %vm1025, %v1000
      %1034 = vst.msk [vmem:[%s221 + $0x20] sm:$0xf] %vm1025, %v1001
      %1035 = vst.msk [vmem:[%s221 + $0x24] sm:$0xf] %vm1025, %v1002
      %1036 = vst.msk [vmem:[%s221 + $0x28] sm:$0xf] %vm1025, %v1003
      %1037 = vst.msk [vmem:[%s221 + $0x2c] sm:$0xf] %vm1025, %v1004
      %1038 = vst.msk [vmem:[%s221 + $0x30] sm:$0xf] %vm1025, %v1005
      %1039 = vst.msk [vmem:[%s221 + $0x34] sm:$0xf] %vm1025, %v1006
      %1040 = vst.msk [vmem:[%s221 + $0x38] sm:$0xf] %vm1025, %v1007
      %1041 = vst.msk [vmem:[%s221 + $0x3c] sm:$0xf] %vm1025, %v1008
      %1042 = vst.msk [vmem:[%s221 + $0x40] sm:$0xf] %vm1025, %v1009
      %1043 = vst.msk [vmem:[%s221 + $0x44] sm:$0xf] %vm1025, %v1010
      %1044 = vst.msk [vmem:[%s221 + $0x48] sm:$0xf] %vm1025, %v1011
      %1045 = vst.msk [vmem:[%s221 + $0x4c] sm:$0xf] %vm1025, %v1012
      %1046 = vst.msk [vmem:[%s221 + $0x50] sm:$0xf] %vm1025, %v1013
      %1047 = vst.msk [vmem:[%s221 + $0x54] sm:$0xf] %vm1025, %v1014
      %1048 = vst.msk [vmem:[%s221 + $0x58] sm:$0xf] %vm1025, %v1015
      %1049 = vst.msk [vmem:[%s221 + $0x5c] sm:$0xf] %vm1025, %v1016
      %1050 = vst.msk [vmem:[%s221 + $0x60] sm:$0xf] %vm1025, %v1017
      %1051 = vst.msk [vmem:[%s221 + $0x64] sm:$0xf] %vm1025, %v1018
      %1052 = vst.msk [vmem:[%s221 + $0x68] sm:$0xf] %vm1025, %v1019
      %1053 = vst.msk [vmem:[%s221 + $0x6c] sm:$0xf] %vm1025, %v1020
      %1054 = vst.msk [vmem:[%s221 + $0x70] sm:$0xf] %vm1025, %v1021
      %1055 = vst.msk [vmem:[%s221 + $0x74] sm:$0xf] %vm1025, %v1022
      %1056 = vst.msk [vmem:[%s221 + $0x78] sm:$0xf] %vm1025, %v1023
      %1057 = vst.msk [vmem:[%s221 + $0x7c] sm:$0xf] %vm1025, %v1024
      %s1058 = smul.u32 32, %s15
      %p1059 = scmp.lt.s32.totalorder %s1058, 63
      %s1060 = scalar_select %p1059, %s1058, 63
      %s1061 = smul.addr %s1060, 4
      %s1062 = scalar_lea.vmem %s4, %s1061
      // Predicated region
      $region37: #{tpu_custom_call.1} parent=35 // pred_check
        %p1063 = pneg %p127
      $region38: #{tpu_custom_call.1} parent=35 // pred_check_branch
        %1065 = sbr.rel (%p1063) target = $region40
      $region39: #{tpu_custom_call.1} parent=35 // pred_region
        %s1066 = smul.u32 32, %s15
      $region40: #{tpu_custom_call.1} parent=35 // pred_fallthru
        _
    $region36: #{tpu_custom_call.1} parent=5 // pred_fallthru
      _
    %p1067 = scmp.le.s32.totalorder 2, %s10
    // Predicated region
    $region41: #{tpu_custom_call.1} parent=5 // pred_check
      %p1068 = pneg %p1067
    $region42: #{tpu_custom_call.1} parent=5 // pred_check_branch
      %1070 = sbr.rel (%p1068) target = $region44
    $region43: #{tpu_custom_call.1} parent=5 // pred_region
      %s1071 = ssub.s32 %s10, 2
      // Predicated region
      $region45: #{tpu_custom_call.1} parent=43 // pred_check
        %p1072 = pneg %p133
      $region46: #{tpu_custom_call.1} parent=43 // pred_check_branch
        %1074 = sbr.rel (%p1072) target = $region48
      $region47: #{tpu_custom_call.1} parent=43 // pred_region
        %s1075 = smul.u32 32, %s16
        %p1076 = scmp.lt.s32.totalorder %s1075, 63
        %s1077 = scalar_select %p1076, %s1075, 63
        %s1078 = smul.addr %s1077, 4
        %s1079 = scalar_lea.vmem %s4, %s1078
      $region48: #{tpu_custom_call.1} parent=43 // pred_fallthru
        _
    $region44: #{tpu_custom_call.1} parent=5 // pred_fallthru
      _
  $region6: #{tpu_custom_call.1} parent=0 // loop_footer
    %s14 = sadd.s32 1, %s10
  $region7: #{tpu_custom_call.1} parent=0 // loop_footer_branch
    %9 = sbr.rel target = $region3
  $region8: #{tpu_custom_call.1} parent=0 // loop_exit
    _

</llo_original>
